<compile_context>
chip_gen: v5e
topology: v5e:2x2
jax: 0.10.0
libtpu: 0.0.40
codegen_flags: <defaults>
</compile_context>

<pallas_src>
import math

import jax
import jax.numpy as jnp
from jax import lax
from jax.experimental import pallas as pl
from jax.experimental.pallas import tpu as pltpu

# ---------------- model dims (small, consistent with a causal LM forward) ----
B = 2        # batch
S = 8        # sequence length (power of two -> bit-trick block-diagonal mask)
D = 32       # hidden size
FF = 64      # MLP hidden
V = 64       # vocab size
VP = 128     # LM head padded to a full 128-lane width (lane-dense store)
N = B * S    # flattened rows
LOG2_S = S.bit_length() - 1

assert S > 0 and (S & (S - 1)) == 0, "block-diagonal mask bit-trick needs power-of-two S"
assert V + D <= VP, "inputs_embeds must fit in the padded lanes of the logits slab"
assert 3 * D <= 128 and FF <= 128 and D <= 128 and V <= VP
assert V % 8 == 0 and FF % 8 == 0

W_SLAB_COLS = 4 * 128   # wqkv | wo | w1 | wlm_pad, each on a 128-lane segment
EW2_ROWS = max(V, FF)   # emb and w2 share one slab (both have D columns)


# ----------------------------- fused Pallas kernel ----------------------------
def fused_lm_kernel(tok_ref, mask_ref, w_ref, ew2_ref, bias_ref, out_ref, loss_ref):
    """Whole batch in one shot: embedding one-hot matmul, block-diagonal causal
    attention with padding mask, MLP, padded LM head, fused shifted CE loss.
    Output slab layout (lane-dense, one unmasked store): [logits_V | embeds_D | 0]."""
    n = out_ref.shape[0]                                 # N = B*S

    # static (zero-cost) views into the pre-packed 128-lane-aligned slabs
    wqkv = w_ref[:, 0:3 * D]                             # (D, 3D)
    wo   = w_ref[:, 128:128 + D]                         # (D, D)
    w1   = w_ref[:, 256:256 + FF]                        # (D, FF)
    wlm  = w_ref[:, 384:384 + VP]                        # (D, VP), cols >= V are zero
    emb  = ew2_ref[0:V, 0:D]                             # (V, D)
    w2   = ew2_ref[0:FF, 128:128 + D]                    # (FF, D)
    bias = bias_ref[...]                                 # (1, 128)
    b1   = bias[:, 0:FF]                                 # (1, FF)
    b2   = bias[:, FF:FF + D]                            # (1, D)

    tok = tok_ref[...]                                   # (N, 2) int32
    ids = tok[:, 0:1]                                    # (N, 1) token ids
    lab = tok[:, 1:2]                                    # (N, 1) shifted labels (-100=ignore)
    key_valid = mask_ref[...] > 0.5                      # (1, N)

    # --- embedding lookup as one-hot matmul (gather-free, MXU friendly) ---
    col_v = lax.broadcasted_iota(jnp.int32, (n, V), 1)   # reused later for CE pick
    onehot = (col_v == ids).astype(jnp.float32)          # (N, V)
    x = jnp.dot(onehot, emb, preferred_element_type=jnp.float32)      # (N, D)

    # --- fused QKV projection: one MXU matmul instead of three ---
    qkv = jnp.dot(x, wqkv, preferred_element_type=jnp.float32)        # (N, 3D)
    q = qkv[:, 0:D]
    k = qkv[:, D:2 * D]
    v = qkv[:, 2 * D:3 * D]

    # --- block-diagonal causal self-attention over the flattened batch ---
    scores = jnp.dot(q, k.T, preferred_element_type=jnp.float32) * (1.0 / math.sqrt(D))
    row = lax.broadcasted_iota(jnp.int32, (n, n), 0)
    col = lax.broadcasted_iota(jnp.int32, (n, n), 1)
    same_batch = jnp.right_shift(row, LOG2_S) == jnp.right_shift(col, LOG2_S)
    causal = jnp.bitwise_and(col, S - 1) <= jnp.bitwise_and(row, S - 1)
    allowed = same_batch & causal & key_valid
    scores = jnp.where(allowed, scores, -1e9)

    m = jnp.max(scores, axis=-1, keepdims=True)
    e = jnp.exp(scores - m)
    p = e / jnp.sum(e, axis=-1, keepdims=True)

    attn = jnp.dot(p, v, preferred_element_type=jnp.float32)
    h = x + jnp.dot(attn, wo, preferred_element_type=jnp.float32)

    # --- MLP block (residual) ---
    ff = jnp.maximum(jnp.dot(h, w1, preferred_element_type=jnp.float32) + b1, 0.0)
    h2 = h + jnp.dot(ff, w2, preferred_element_type=jnp.float32) + b2

    # --- LM head (zero-padded to 128 lanes) ---
    logits_full = jnp.dot(h2, wlm, preferred_element_type=jnp.float32)   # (N, VP)
    logits_v = logits_full[:, 0:V]                                       # (N, V)

    # single lane-dense (N, 128) output slab: [logits | inputs_embeds | 0]
    pieces = [logits_v, x]
    if VP > V + D:
        pieces.append(jnp.zeros((n, VP - V - D), jnp.float32))
    out_ref[...] = jnp.concatenate(pieces, axis=1)

    # --- fused shifted cross-entropy (mean over labels != -100) ---
    mx = jnp.max(logits_v, axis=-1, keepdims=True)
    lse = mx + jnp.log(jnp.sum(jnp.exp(logits_v - mx), axis=-1, keepdims=True))
    picked = jnp.sum(jnp.where(col_v == lab, logits_v, 0.0), axis=-1, keepdims=True)
    valid = (lab != -100).astype(jnp.float32)
    nll = (lse - picked) * valid
    # Matches torch CrossEntropyLoss(mean): 0/0 -> NaN when every label is ignored
    # (the NaN is discarded by the wrapper when labels is None).
    loss_ref[0, 0] = jnp.sum(nll) / jnp.sum(valid)


# --------------------- one-time parameter packing (hoisted) -------------------
def prepare_params(params):
    """Pack the 10 tiny parameter tensors into 3 lane-aligned slabs, ONCE."""
    w_slab = jnp.zeros((D, W_SLAB_COLS), jnp.float32)
    w_slab = w_slab.at[:, 0:3 * D].set(
        jnp.concatenate([params["wq"], params["wk"], params["wv"]], axis=1))
    w_slab = w_slab.at[:, 128:128 + D].set(params["wo"])
    w_slab = w_slab.at[:, 256:256 + FF].set(params["w1"])
    w_slab = w_slab.at[:, 384:384 + V].set(params["wlm"])   # lanes 384+V..512 stay zero

    ew2_slab = jnp.zeros((EW2_ROWS, 256), jnp.float32)
    ew2_slab = ew2_slab.at[0:V, 0:D].set(params["emb"])
    ew2_slab = ew2_slab.at[0:FF, 128:128 + D].set(params["w2"])

    bias_slab = jnp.zeros((1, 128), jnp.float32)
    bias_slab = bias_slab.at[:, 0:FF].set(params["b1"])
    bias_slab = bias_slab.at[:, FF:FF + D].set(params["b2"])

    return {"w_slab": w_slab, "ew2_slab": ew2_slab, "bias_slab": bias_slab}


# ------------------------------ wrapper ---------------------------------------
@jax.jit
def dtt_forward(prepped, input_ids, attention_mask, labels=None):
    """Mirrors DTTModel.forward: returns (loss, inputs_embeds, logits)."""
    ids_flat = input_ids.astype(jnp.int32).reshape(N)
    if labels is not None:
        shift = jnp.concatenate(
            [labels.astype(jnp.int32)[:, 1:], jnp.full((B, 1), -100, jnp.int32)],
            axis=1).reshape(N)
    else:
        shift = jnp.full((N,), -100, jnp.int32)
    tok_lab = jnp.stack([ids_flat, shift], axis=1)                   # (N, 2) int32
    mask = attention_mask.astype(jnp.float32).reshape(1, N)          # lane-major

    vmem = pltpu.MemorySpace.VMEM
    slab, loss11 = pl.pallas_call(
        fused_lm_kernel,
        out_shape=(jax.ShapeDtypeStruct((N, VP), jnp.float32),       # [logits|embeds|0]
                   jax.ShapeDtypeStruct((1, 1), jnp.float32)),       # scalar loss
        in_specs=[pl.BlockSpec(memory_space=vmem)] * 5,
        out_specs=(pl.BlockSpec(memory_space=vmem),
                   pl.BlockSpec(memory_space=pltpu.MemorySpace.SMEM)),
    )(tok_lab, mask, prepped["w_slab"], prepped["ew2_slab"], prepped["bias_slab"])

    logits = slab[:, :V].reshape(B, S, V)
    inputs_embeds = slab[:, V:V + D].reshape(B, S, D)
    loss = loss11[0, 0] if labels is not None else None
    return loss, inputs_embeds, logits
    # NOTE(perf): if many (B,S) samples are processed per step, stack them along
    # the row axis (target >= 128 rows) before calling; on v7x add a "parallel"
    # row-block grid axis so the flattened batch shards across both TensorCores.


# --------------------- deterministic parameter init ---------------------------
def init_params(key):
    ks = jax.random.split(key, 10)
    scale = 0.05
    return {
        "emb": jax.random.normal(ks[0], (V, D), jnp.float32) * scale,
        "wq":  jax.random.normal(ks[1], (D, D), jnp.float32) * scale,
        "wk":  jax.random.normal(ks[2], (D, D), jnp.float32) * scale,
        "wv":  jax.random.normal(ks[3], (D, D), jnp.float32) * scale,
        "wo":  jax.random.normal(ks[4], (D, D), jnp.float32) * scale,
        "w1":  jax.random.normal(ks[5], (D, FF), jnp.float32) * scale,
        "b1":  jnp.zeros((1, FF), jnp.float32),
        "w2":  jax.random.normal(ks[6], (FF, D), jnp.float32) * scale,
        "b2":  jnp.zeros((1, D), jnp.float32),
        "wlm": jax.random.normal(ks[7], (D, V), jnp.float32) * scale,
    }


# ------------------------- pure-JAX reference check ---------------------------
def reference_forward(params, input_ids, attention_mask, labels):
    x = params["emb"][input_ids]                                      # (B, S, D)
    q = x @ params["wq"]; k = x @ params["wk"]; v = x @ params["wv"]
    scores = jnp.einsum("bqd,bkd->bqk", q, k) / math.sqrt(D)
    row = jnp.arange(S)[:, None]; col = jnp.arange(S)[None, :]
    allowed = (col <= row)[None] & (attention_mask[:, None, :] > 0.5)
    scores = jnp.where(allowed, scores, -1e9)
    p = jax.nn.softmax(scores, axis=-1)
    h = x + jnp.einsum("bqk,bkd->bqd", p, v) @ params["wo"]
    ff = jax.nn.relu(h @ params["w1"] + params["b1"][0])
    h2 = h + ff @ params["w2"] + params["b2"][0]
    logits = h2 @ params["wlm"]
    # shifted CE with ignore_index=-100 (matches torch CrossEntropyLoss default)
    sl = logits[:, :-1, :].reshape(-1, V)
    lab = labels[:, 1:].reshape(-1)
    valid = lab != -100
    lse = jax.nn.logsumexp(sl, axis=-1)
    safe = jnp.where(valid, lab, 0)
    nll = lse - sl[jnp.arange(sl.shape[0]), safe]
    loss = jnp.sum(jnp.where(valid, nll, 0.0)) / jnp.sum(valid).astype(jnp.float32)
    return loss, x, logits


if __name__ == "__main__":
    key = jax.random.PRNGKey(0)
    pkey, ikey, lkey = jax.random.split(key, 3)

    params = init_params(pkey)
    prepped = prepare_params(params)            # one-time weight packing (hoisted)
    jax.block_until_ready(prepped)

    input_ids = jax.random.randint(ikey, (B, S), 0, V, dtype=jnp.int32)
    attention_mask = jnp.ones((B, S), jnp.int32).at[1, S - 1].set(0)   # padding path
    labels = jax.random.randint(lkey, (B, S), 0, V, dtype=jnp.int32)
    labels = labels.at[0, 3].set(-100)                                 # ignore_index path

    loss, inputs_embeds, logits = dtt_forward(prepped, input_ids, attention_mask, labels)
    jax.block_until_ready((loss, inputs_embeds, logits))

    # sanity check against pure-JAX reference
    ref_loss, ref_embeds, ref_logits = reference_forward(params, input_ids,
                                                         attention_mask, labels)
    assert jnp.allclose(inputs_embeds, ref_embeds, atol=1e-3, rtol=1e-3)
    assert jnp.allclose(logits, ref_logits, atol=1e-3, rtol=1e-3)
    assert jnp.allclose(loss, ref_loss, atol=1e-3, rtol=1e-3)

    # labels=None path: loss must be None, logits/embeds unchanged
    loss_none, e2, l2 = dtt_forward(prepped, input_ids, attention_mask, None)
    jax.block_until_ready((e2, l2))
    assert loss_none is None
    assert jnp.allclose(l2, ref_logits, atol=1e-3, rtol=1e-3)
    assert jnp.allclose(e2, ref_embeds, atol=1e-3, rtol=1e-3)

    # TODO(synk): DTTModel.generate uses torch.distributed + multinomial sampling
    # loops with a KV cache; that autoregressive control flow is not translated.
    print("KERNEL_OK")
</pallas_src>

<mosaic_0001>
module attributes {stable_mosaic.version = 11 : i64} {
  func.func @fused_lm_kernel(%arg0: memref<16x2xi32, #tpu.memory_space<vmem>>, %arg1: memref<1x16xf32, #tpu.memory_space<vmem>>, %arg2: memref<32x512xf32, #tpu.memory_space<vmem>>, %arg3: memref<64x256xf32, #tpu.memory_space<vmem>>, %arg4: memref<1x128xf32, #tpu.memory_space<vmem>>, %arg5: memref<16x128xf32, #tpu.memory_space<vmem>>, %arg6: memref<1x1xf32, #tpu.memory_space<smem>>) attributes {dimension_semantics = [], scalar_prefetch = 0 : i64, scratch_operands = 0 : i64, tpu.core_type = #tpu.core_type<tc>} {
    %c0 = arith.constant 0 : index
    %c0_0 = arith.constant 0 : index
    %0 = vector.load %arg2[%c0, %c0_0] : memref<32x512xf32, #tpu.memory_space<vmem>>, vector<32x96xf32>
    %c0_1 = arith.constant 0 : index
    %c128 = arith.constant 128 : index
    %1 = vector.load %arg2[%c0_1, %c128] : memref<32x512xf32, #tpu.memory_space<vmem>>, vector<32x32xf32>
    %c0_2 = arith.constant 0 : index
    %c256 = arith.constant 256 : index
    %2 = vector.load %arg2[%c0_2, %c256] : memref<32x512xf32, #tpu.memory_space<vmem>>, vector<32x64xf32>
    %c0_3 = arith.constant 0 : index
    %c384 = arith.constant 384 : index
    %3 = vector.load %arg2[%c0_3, %c384] : memref<32x512xf32, #tpu.memory_space<vmem>>, vector<32x128xf32>
    %c0_4 = arith.constant 0 : index
    %c0_5 = arith.constant 0 : index
    %4 = vector.load %arg3[%c0_4, %c0_5] : memref<64x256xf32, #tpu.memory_space<vmem>>, vector<64x32xf32>
    %c0_6 = arith.constant 0 : index
    %c128_7 = arith.constant 128 : index
    %5 = vector.load %arg3[%c0_6, %c128_7] : memref<64x256xf32, #tpu.memory_space<vmem>>, vector<64x32xf32>
    %c0_8 = arith.constant 0 : index
    %c0_9 = arith.constant 0 : index
    %6 = vector.load %arg4[%c0_8, %c0_9] : memref<1x128xf32, #tpu.memory_space<vmem>>, vector<1x128xf32>
    %7 = vector.extract_strided_slice %6 {offsets = [0, 0], sizes = [1, 64], strides = [1, 1]} : vector<1x128xf32> to vector<1x64xf32>
    %8 = vector.extract_strided_slice %6 {offsets = [0, 64], sizes = [1, 32], strides = [1, 1]} : vector<1x128xf32> to vector<1x32xf32>
    %c0_10 = arith.constant 0 : index
    %c0_11 = arith.constant 0 : index
    %9 = vector.load %arg0[%c0_10, %c0_11] : memref<16x2xi32, #tpu.memory_space<vmem>>, vector<16x2xi32>
    %10 = vector.extract_strided_slice %9 {offsets = [0, 0], sizes = [16, 1], strides = [1, 1]} : vector<16x2xi32> to vector<16x1xi32>
    %11 = vector.extract_strided_slice %9 {offsets = [0, 1], sizes = [16, 1], strides = [1, 1]} : vector<16x2xi32> to vector<16x1xi32>
    %c0_12 = arith.constant 0 : index
    %c0_13 = arith.constant 0 : index
    %12 = vector.load %arg1[%c0_12, %c0_13] : memref<1x16xf32, #tpu.memory_space<vmem>>, vector<1x16xf32>
    %cst = arith.constant 5.000000e-01 : f32
    %13 = vector.broadcast %cst : f32 to vector<1x16xf32>
    %14 = arith.cmpf ogt, %12, %13 : vector<1x16xf32>
    %15 = tpu.iota {dimensions = array<i32: 1>} : vector<16x64xi32>
    %16 = vector.broadcast %10 : vector<16x1xi32> to vector<16x64xi32>
    %17 = arith.cmpi eq, %15, %16 : vector<16x64xi32>
    %18 = arith.extui %17 : vector<16x64xi1> to vector<16x64xi32>
    %19 = arith.sitofp %18 : vector<16x64xi32> to vector<16x64xf32>
    %cst_14 = arith.constant dense<0.000000e+00> : vector<16x32xf32>
    %20 = tpu.matmul %19, %4, %cst_14 {dimension_numbers = #tpu.dot_dimension_numbers<[1], [0], [0], [1], [0, 0, 1, 1], [], []>} : vector<16x64xf32>, vector<64x32xf32>, vector<16x32xf32> -> vector<16x32xf32>
    %cst_15 = arith.constant dense<0.000000e+00> : vector<16x96xf32>
    %21 = tpu.matmul %20, %0, %cst_15 {dimension_numbers = #tpu.dot_dimension_numbers<[1], [0], [0], [1], [0, 0, 1, 1], [], []>} : vector<16x32xf32>, vector<32x96xf32>, vector<16x96xf32> -> vector<16x96xf32>
    %22 = vector.extract_strided_slice %21 {offsets = [0, 0], sizes = [16, 32], strides = [1, 1]} : vector<16x96xf32> to vector<16x32xf32>
    %23 = vector.extract_strided_slice %21 {offsets = [0, 32], sizes = [16, 32], strides = [1, 1]} : vector<16x96xf32> to vector<16x32xf32>
    %24 = vector.extract_strided_slice %21 {offsets = [0, 64], sizes = [16, 32], strides = [1, 1]} : vector<16x96xf32> to vector<16x32xf32>
    %25 = tpu.transpose %23, [1, 0] : vector<16x32xf32> -> vector<32x16xf32>
    %cst_16 = arith.constant dense<0.000000e+00> : vector<16x16xf32>
    %26 = tpu.matmul %22, %25, %cst_16 {dimension_numbers = #tpu.dot_dimension_numbers<[1], [0], [0], [1], [0, 0, 1, 1], [], []>} : vector<16x32xf32>, vector<32x16xf32>, vector<16x16xf32> -> vector<16x16xf32>
    %cst_17 = arith.constant 0.176776692 : f32
    %27 = vector.broadcast %cst_17 : f32 to vector<16x16xf32>
    %28 = arith.mulf %26, %27 : vector<16x16xf32>
    %29 = tpu.iota {dimensions = array<i32: 0>} : vector<16x16xi32>
    %30 = tpu.iota {dimensions = array<i32: 1>} : vector<16x16xi32>
    %c3_i32 = arith.constant 3 : i32
    %31 = vector.broadcast %c3_i32 : i32 to vector<16x16xi32>
    %32 = arith.shrsi %29, %31 : vector<16x16xi32>
    %c3_i32_18 = arith.constant 3 : i32
    %33 = vector.broadcast %c3_i32_18 : i32 to vector<16x16xi32>
    %34 = arith.shrsi %30, %33 : vector<16x16xi32>
    %35 = arith.cmpi eq, %32, %34 : vector<16x16xi32>
    %c7_i32 = arith.constant 7 : i32
    %36 = vector.broadcast %c7_i32 : i32 to vector<16x16xi32>
    %37 = arith.andi %30, %36 : vector<16x16xi32>
    %c7_i32_19 = arith.constant 7 : i32
    %38 = vector.broadcast %c7_i32_19 : i32 to vector<16x16xi32>
    %39 = arith.andi %29, %38 : vector<16x16xi32>
    %40 = arith.cmpi sle, %37, %39 : vector<16x16xi32>
    %41 = arith.andi %35, %40 : vector<16x16xi1>
    %42 = vector.broadcast %14 : vector<1x16xi1> to vector<16x16xi1>
    %43 = arith.andi %41, %42 : vector<16x16xi1>
    %cst_20 = arith.constant -1.000000e+09 : f32
    %44 = vector.broadcast %cst_20 : f32 to vector<16x16xf32>
    %45 = arith.select %43, %28, %44 : vector<16x16xi1>, vector<16x16xf32>
    %cst_21 = arith.constant dense<0xFF800000> : vector<16xf32>
    %46 = vector.multi_reduction <maximumf>, %45, %cst_21 [1] : vector<16x16xf32> to vector<16xf32>
    %47 = vector.shape_cast %46 : vector<16xf32> to vector<16x1xf32>
    %48 = vector.broadcast %47 : vector<16x1xf32> to vector<16x16xf32>
    %49 = arith.subf %45, %48 : vector<16x16xf32>
    %50 = math.exp %49 : vector<16x16xf32>
    %cst_22 = arith.constant dense<0.000000e+00> : vector<16xf32>
    %51 = vector.multi_reduction <add>, %50, %cst_22 [1] : vector<16x16xf32> to vector<16xf32>
    %52 = vector.shape_cast %51 : vector<16xf32> to vector<16x1xf32>
    %53 = vector.broadcast %52 : vector<16x1xf32> to vector<16x16xf32>
    %54 = arith.divf %50, %53 : vector<16x16xf32>
    %cst_23 = arith.constant dense<0.000000e+00> : vector<16x32xf32>
    %55 = tpu.matmul %54, %24, %cst_23 {dimension_numbers = #tpu.dot_dimension_numbers<[1], [0], [0], [1], [0, 0, 1, 1], [], []>} : vector<16x16xf32>, vector<16x32xf32>, vector<16x32xf32> -> vector<16x32xf32>
    %cst_24 = arith.constant dense<0.000000e+00> : vector<16x32xf32>
    %56 = tpu.matmul %55, %1, %cst_24 {dimension_numbers = #tpu.dot_dimension_numbers<[1], [0], [0], [1], [0, 0, 1, 1], [], []>} : vector<16x32xf32>, vector<32x32xf32>, vector<16x32xf32> -> vector<16x32xf32>
    %57 = arith.addf %20, %56 : vector<16x32xf32>
    %cst_25 = arith.constant dense<0.000000e+00> : vector<16x64xf32>
    %58 = tpu.matmul %57, %2, %cst_25 {dimension_numbers = #tpu.dot_dimension_numbers<[1], [0], [0], [1], [0, 0, 1, 1], [], []>} : vector<16x32xf32>, vector<32x64xf32>, vector<16x64xf32> -> vector<16x64xf32>
    %59 = vector.broadcast %7 : vector<1x64xf32> to vector<16x64xf32>
    %60 = arith.addf %58, %59 : vector<16x64xf32>
    %cst_26 = arith.constant 0.000000e+00 : f32
    %61 = vector.broadcast %cst_26 : f32 to vector<16x64xf32>
    %62 = arith.maximumf %60, %61 : vector<16x64xf32>
    %cst_27 = arith.constant dense<0.000000e+00> : vector<16x32xf32>
    %63 = tpu.matmul %62, %5, %cst_27 {dimension_numbers = #tpu.dot_dimension_numbers<[1], [0], [0], [1], [0, 0, 1, 1], [], []>} : vector<16x64xf32>, vector<64x32xf32>, vector<16x32xf32> -> vector<16x32xf32>
    %64 = arith.addf %57, %63 : vector<16x32xf32>
    %65 = vector.broadcast %8 : vector<1x32xf32> to vector<16x32xf32>
    %66 = arith.addf %64, %65 : vector<16x32xf32>
    %cst_28 = arith.constant dense<0.000000e+00> : vector<16x128xf32>
    %67 = tpu.matmul %66, %3, %cst_28 {dimension_numbers = #tpu.dot_dimension_numbers<[1], [0], [0], [1], [0, 0, 1, 1], [], []>} : vector<16x32xf32>, vector<32x128xf32>, vector<16x128xf32> -> vector<16x128xf32>
    %68 = vector.extract_strided_slice %67 {offsets = [0, 0], sizes = [16, 64], strides = [1, 1]} : vector<16x128xf32> to vector<16x64xf32>
    %cst_29 = arith.constant 0.000000e+00 : f32
    %69 = vector.broadcast %cst_29 : f32 to vector<16x32xf32>
    %70 = tpu.concatenate %68, %20, %69 in 1 : vector<16x64xf32>, vector<16x32xf32>, vector<16x32xf32> -> vector<16x128xf32>
    %c0_30 = arith.constant 0 : index
    %c0_31 = arith.constant 0 : index
    %71 = vector.load %arg5[%c0_30, %c0_31] : memref<16x128xf32, #tpu.memory_space<vmem>>, vector<16x128xf32>
    tpu.vector_store %arg5[%c0_30, %c0_31], %70 {strides = array<i32>} : memref<16x128xf32, #tpu.memory_space<vmem>>, vector<16x128xf32>,
    %cst_32 = arith.constant dense<0xFF800000> : vector<16xf32>
    %72 = vector.multi_reduction <maximumf>, %68, %cst_32 [1] : vector<16x64xf32> to vector<16xf32>
    %73 = vector.shape_cast %72 : vector<16xf32> to vector<16x1xf32>
    %74 = vector.broadcast %73 : vector<16x1xf32> to vector<16x64xf32>
    %75 = arith.subf %68, %74 : vector<16x64xf32>
    %76 = math.exp %75 : vector<16x64xf32>
    %cst_33 = arith.constant dense<0.000000e+00> : vector<16xf32>
    %77 = vector.multi_reduction <add>, %76, %cst_33 [1] : vector<16x64xf32> to vector<16xf32>
    %78 = vector.shape_cast %77 : vector<16xf32> to vector<16x1xf32>
    %79 = math.log %78 : vector<16x1xf32>
    %80 = arith.addf %73, %79 : vector<16x1xf32>
    %81 = vector.broadcast %11 : vector<16x1xi32> to vector<16x64xi32>
    %82 = arith.cmpi eq, %15, %81 : vector<16x64xi32>
    %cst_34 = arith.constant 0.000000e+00 : f32
    %83 = vector.broadcast %cst_34 : f32 to vector<16x64xf32>
    %84 = arith.select %82, %68, %83 : vector<16x64xi1>, vector<16x64xf32>
    %cst_35 = arith.constant dense<0.000000e+00> : vector<16xf32>
    %85 = vector.multi_reduction <add>, %84, %cst_35 [1] : vector<16x64xf32> to vector<16xf32>
    %86 = vector.shape_cast %85 : vector<16xf32> to vector<16x1xf32>
    %c-100_i32 = arith.constant -100 : i32
    %87 = vector.broadcast %c-100_i32 : i32 to vector<16x1xi32>
    %88 = arith.cmpi ne, %11, %87 : vector<16x1xi32>
    %89 = arith.extui %88 : vector<16x1xi1> to vector<16x1xi32>
    %90 = arith.sitofp %89 : vector<16x1xi32> to vector<16x1xf32>
    %91 = arith.subf %80, %86 : vector<16x1xf32>
    %92 = arith.mulf %91, %90 : vector<16x1xf32>
    %93 = vector.shape_cast %92 : vector<16x1xf32> to vector<1x16x1xf32>
    %cst_36 = arith.constant dense<0.000000e+00> : vector<1xf32>
    %94 = vector.multi_reduction <add>, %93, %cst_36 [1, 2] : vector<1x16x1xf32> to vector<1xf32>
    %95 = vector.shape_cast %94 : vector<1xf32> to vector<1x1x1xf32>
    %96 = vector.extract %95[0, 0, 0] : f32 from vector<1x1x1xf32>
    %97 = vector.shape_cast %90 : vector<16x1xf32> to vector<1x16x1xf32>
    %cst_37 = arith.constant dense<0.000000e+00> : vector<1xf32>
    %98 = vector.multi_reduction <add>, %97, %cst_37 [1, 2] : vector<1x16x1xf32> to vector<1xf32>
    %99 = vector.shape_cast %98 : vector<1xf32> to vector<1x1x1xf32>
    %100 = vector.extract %99[0, 0, 0] : f32 from vector<1x1x1xf32>
    %101 = arith.divf %96, %100 : f32
    %c0_38 = arith.constant 0 : index
    %c0_39 = arith.constant 0 : index
    %102 = memref.load %arg6[%c0_38, %c0_39] : memref<1x1xf32, #tpu.memory_space<smem>>
    memref.store %101, %arg6[%c0_38, %c0_39] : memref<1x1xf32, #tpu.memory_space<smem>>
    return
  }
}

</mosaic_0001>

<llo_original>
// kernel: dtt_forward.1
$region0: #{dtt_forward.1}
  #allocation0 [shape = 'u32[]', space=smem, size = 0x4, offset = 0x4, fixed_abs, tag = 'smem constant byte address 0x4 - core index']
  #allocation1 [shape = 'u32[72,128]{1,0:T(1,128)}', space=vmem, size = 0x9000, scoped, tag = 'internal scratch']
  %s0 = inlined_call_operand.vmem [shape: s32[16,2], index: 0, kind: input, shape index: {}]
  %s1 = inlined_call_operand.vmem [shape: f32[1,16], index: 1, kind: input, shape index: {}]
  %s2 = inlined_call_operand.hbm [shape: f32[32,512], index: 2, kind: input, shape index: {}]
  %s3 = inlined_call_operand.hbm [shape: f32[64,256], index: 3, kind: input, shape index: {}]
  %s4 = inlined_call_operand.vmem [shape: f32[1,128], index: 4, kind: input, shape index: {}]
  %s5 = inlined_call_operand.vmem [shape: f32[16,128], index: 5, kind: output, shape index: {0}]
  %s6 = inlined_call_operand.hbm [shape: f32[1,1], index: 6, kind: output, shape index: {1}]
  %7 = xla_tuple %s5, %s6
  %s8 = sld [smem:[#allocation0]]
  $region46: #{dtt_forward.1} parent=0
    _
  %s10 = ssub.s32 1, %s8
  %s11 = scalar_select 0, %s10, %s8
  $region1: #{dtt_forward.1} parent=0
    #allocation2 [shape = 'u8[65536]{0}', space=vmem, size = 0x10000, scoped, tag = 'input window, operand 2, single buffered']
    #allocation3 [shape = 's32[1]{0}', space=sflag, size = 0x4, scoped, tag = 'scoped memory for dtt_forward.1']
    #allocation4 [shape = 's32[1]{0}', space=sflag, size = 0x4, scoped, tag = 'scoped memory for dtt_forward.1']
    #allocation5 [shape = 'u8[65536]{0}', space=vmem, size = 0x10000, scoped, tag = 'input window, operand 3, single buffered']
    #allocation6 [shape = 's32[1]{0}', space=sflag, size = 0x4, scoped, tag = 'scoped memory for dtt_forward.1']
    #allocation7 [shape = 'u8[512]{0}', space=smem, size = 0x200, scoped, tag = 'output window, operand 1, single buffered']
    %12 = vsyncpa [#allocation3], 0
    %13 = vsyncpa [#allocation6], 0
    %14 = vsyncpa [#allocation4], 0
    // Predicated region
    $region2: #{dtt_forward.1} parent=1 // pred_check
      _
    $region3: #{dtt_forward.1} parent=1 // pred_check_branch
      %16 = sbr.rel (0) target = $region5
    $region4: #{dtt_forward.1} parent=1 // pred_region
      _
    $region5: #{dtt_forward.1} parent=1 // pred_fallthru
      _
    // Predicated region
    $region6: #{dtt_forward.1} parent=1 // pred_check
      _
    $region7: #{dtt_forward.1} parent=1 // pred_check_branch
      %18 = sbr.rel (0) target = $region9
    $region8: #{dtt_forward.1} parent=1 // pred_region
      _
    $region9: #{dtt_forward.1} parent=1 // pred_fallthru
      _
    // Predicated region
    $region10: #{dtt_forward.1} parent=1 // pred_check
      _
    $region11: #{dtt_forward.1} parent=1 // pred_check_branch
      %20 = sbr.rel (0) target = $region13
    $region12: #{dtt_forward.1} parent=1 // pred_region
      %22 = vsyncadd [#allocation3], 0
      %s23 = sshll.u32 %s2, 4
      %s24 = int_to_ptr.hbm [resolvable:$true] %s23
      %s25 = sshll.u32 [#allocation2], 4
      %s26 = int_to_ptr.vmem [resolvable:$true] %s25
      %31 = dma.hbm_to_vmem [thread:$0]  %s24, 2048, %s26, [#allocation3], 512, 512, 32
    $region13: #{dtt_forward.1} parent=1 // pred_fallthru
      _
    // Predicated region
    $region14: #{dtt_forward.1} parent=1 // pred_check
      _
    $region15: #{dtt_forward.1} parent=1 // pred_check_branch
      %33 = sbr.rel (0) target = $region17
    $region16: #{dtt_forward.1} parent=1 // pred_region
      %35 = vsyncadd [#allocation6], 0
      %s36 = sshll.u32 %s3, 4
      %s37 = int_to_ptr.hbm [resolvable:$true] %s36
      %s38 = sshll.u32 [#allocation5], 4
      %s39 = int_to_ptr.vmem [resolvable:$true] %s38
      %44 = dma.hbm_to_vmem [thread:$0]  %s37, 2048, %s39, [#allocation6], 256, 256, 16
    $region17: #{dtt_forward.1} parent=1 // pred_fallthru
      _
    // Predicated region
    $region18: #{dtt_forward.1} parent=1 // pred_check
      _
    $region19: #{dtt_forward.1} parent=1 // pred_check_branch
      %46 = sbr.rel (0) target = $region21
    $region20: #{dtt_forward.1} parent=1 // pred_region
      _
    $region21: #{dtt_forward.1} parent=1 // pred_fallthru
      _
    // Predicated region
    $region22: #{dtt_forward.1} parent=1 // pred_check
      _
    $region23: #{dtt_forward.1} parent=1 // pred_check_branch
      %48 = sbr.rel (0) target = $region25
    $region24: #{dtt_forward.1} parent=1 // pred_region
      %50 = dma.done [#allocation3], 2048
    $region25: #{dtt_forward.1} parent=1 // pred_fallthru
      _
    // Predicated region
    $region26: #{dtt_forward.1} parent=1 // pred_check
      _
    $region27: #{dtt_forward.1} parent=1 // pred_check_branch
      %52 = sbr.rel (0) target = $region29
    $region28: #{dtt_forward.1} parent=1 // pred_region
      %54 = dma.done [#allocation6], 2048
    $region29: #{dtt_forward.1} parent=1 // pred_fallthru
      _
    %v55 = vld [vmem:[#allocation2] sm:$0xff]
    %v56 = vld [vmem:[#allocation2 + $0x20] sm:$0xff]
    %v57 = vld [vmem:[#allocation2 + $0x40] sm:$0xff]
    %v58 = vld [vmem:[#allocation2 + $0x60] sm:$0xff]
    %v59 = vld [vmem:[#allocation2 + $0x8] sm:$0xff]
    %v60 = vld [vmem:[#allocation2 + $0x28] sm:$0xff]
    %v61 = vld [vmem:[#allocation2 + $0x48] sm:$0xff]
    %v62 = vld [vmem:[#allocation2 + $0x68] sm:$0xff]
    %v63 = vld [vmem:[#allocation2 + $0x10] sm:$0xff]
    %v64 = vld [vmem:[#allocation2 + $0x30] sm:$0xff]
    %v65 = vld [vmem:[#allocation2 + $0x50] sm:$0xff]
    %v66 = vld [vmem:[#allocation2 + $0x70] sm:$0xff]
    %v67 = vld [vmem:[#allocation2 + $0x18] sm:$0xff]
    %v68 = vld [vmem:[#allocation2 + $0x38] sm:$0xff]
    %v69 = vld [vmem:[#allocation2 + $0x58] sm:$0xff]
    %v70 = vld [vmem:[#allocation2 + $0x78] sm:$0xff]
    %v71 = vld [vmem:[#allocation5] sm:$0xff]
    %v72 = vld [vmem:[#allocation5 + $0x10] sm:$0xff]
    %v73 = vld [vmem:[#allocation5 + $0x20] sm:$0xff]
    %v74 = vld [vmem:[#allocation5 + $0x30] sm:$0xff]
    %v75 = vld [vmem:[#allocation5 + $0x40] sm:$0xff]
    %v76 = vld [vmem:[#allocation5 + $0x50] sm:$0xff]
    %v77 = vld [vmem:[#allocation5 + $0x60] sm:$0xff]
    %v78 = vld [vmem:[#allocation5 + $0x70] sm:$0xff]
    %v79 = vld [vmem:[#allocation5 + $0x8] sm:$0xff]
    %v80 = vld [vmem:[#allocation5 + $0x18] sm:$0xff]
    %v81 = vld [vmem:[#allocation5 + $0x28] sm:$0xff]
    %v82 = vld [vmem:[#allocation5 + $0x38] sm:$0xff]
    %v83 = vld [vmem:[#allocation5 + $0x48] sm:$0xff]
    %v84 = vld [vmem:[#allocation5 + $0x58] sm:$0xff]
    %v85 = vld [vmem:[#allocation5 + $0x68] sm:$0xff]
    %v86 = vld [vmem:[#allocation5 + $0x78] sm:$0xff]
    %v87 = vld [vmem:[%s4] sm:$0x1]
    %v88 = vld [vmem:[%s0] sm:$0xff]
    %v89 = vld [vmem:[%s0 + $0x8] sm:$0xff]
    %v90 = vld [vmem:[%s1] sm:$0x1]
    %vm91 = vcmp.gt.f32.partialorder %v90, 0.5
    %v92 = vlaneseq
    %v93 = vand.u32 %v92, 127
    %94 = vset.pattern.permute.xlu0 0
    %95 = vperm.xlu0 %94, %v88
    %v96 = vpop.permute.xlu0 %95
    %97 = vset.pattern.permute.xlu0 0
    %98 = vperm.xlu0 %97, %v89
    %v99 = vpop.permute.xlu0 %98
    %vm100 = vcmp.eq.s32.totalorder %v93, %v96
    %vm101 = vcmp.eq.s32.totalorder %v93, %v99
    %v102 = vsel %vm100, 1, 0
    %v103 = vsel %vm101, 1, 0
    %v104 = vcvt.s32.f32 %v102
    %v105 = vcvt.s32.f32 %v103
    %vm106 = vcmask 523264
    %v108 = vsel %vm106, %v104, 0
    %v111 = vsel %vm106, %v105, 0
    %113 = vmatpush.msra.mxu0 0.0
    %114 = vmatpush.msra.mxu0 0.0
    %115 = vmatpush.msra.mxu0 0.0
    %116 = vmatpush.msra.mxu0 0.0
    %117 = vmatpush.msra.mxu0 0.0
    %118 = vmatpush.msra.mxu0 0.0
    %119 = vmatpush.msra.mxu0 0.0
    %120 = vmatpush.msra.mxu0 0.0
    %121 = vmatpush.msra.mxu0 %v78
    %122 = vmatpush.msra.mxu0 %v77
    %123 = vmatpush.msra.mxu0 %v76
    %124 = vmatpush.msra.mxu0 %v75
    %125 = vmatpush.msra.mxu0 %v74
    %126 = vmatpush.msra.mxu0 %v73
    %127 = vmatpush.msra.mxu0 %v72
    %128 = vmatpush.msra.mxu0 %v71
    %129 = vmatmul.f32.gmra.mxu0 %v108
    %v130 = vpop.f32.mrf.mxu0
    %v131 = vadd.f32 0.0, %v130
    %132 = vmatmul.f32.gmra.mxu0 %v111
    %v133 = vpop.f32.mrf.mxu0
    %v134 = vadd.f32 0.0, %v133
    %135 = vdwg.mxu0
    %vm136 = vcmask 261120
    %v138 = vsel %vm136, %v131, 0
    %v141 = vsel %vm136, %v134, 0
    %143 = vmatpush.msra.mxu0 0.0
    %144 = vmatpush.msra.mxu0 0.0
    %145 = vmatpush.msra.mxu0 0.0
    %146 = vmatpush.msra.mxu0 0.0
    %147 = vmatpush.msra.mxu0 0.0
    %148 = vmatpush.msra.mxu0 0.0
    %149 = vmatpush.msra.mxu0 0.0
    %150 = vmatpush.msra.mxu0 0.0
    %151 = vmatpush.msra.mxu0 0.0
    %152 = vmatpush.msra.mxu0 0.0
    %153 = vmatpush.msra.mxu0 0.0
    %154 = vmatpush.msra.mxu0 0.0
    %155 = vmatpush.msra.mxu0 %v58
    %156 = vmatpush.msra.mxu0 %v57
    %157 = vmatpush.msra.mxu0 %v56
    %158 = vmatpush.msra.mxu0 %v55
    %159 = vmatmul.f32.gmra.mxu0 %v138
    %v160 = vpop.f32.mrf.mxu0
    %v161 = vadd.f32 0.0, %v160
    %162 = vmatmul.f32.gmra.mxu0 %v141
    %v163 = vpop.f32.mrf.mxu0
    %v164 = vadd.f32 0.0, %v163
    %165 = vdwg.mxu0
    %168 = vrot.lane.b32.xlu0 %v161, 96
    %v169 = vpop.permute.xlu0 %168
    %170 = vrot.lane.b32.xlu0 %v164, 96
    %v171 = vpop.permute.xlu0 %170
    %v172 = vsel %vm136, %v161, 0
    %v174 = vsel %vm136, %v164, 0
    %v176 = vsel %vm136, %v169, 0
    %v178 = vsel %vm136, %v171, 0
    %180 = vmatpush.xpose.msra.mxu0 0.0
    %181 = vmatpush.xpose.msra.mxu0 0.0
    %182 = vmatpush.xpose.msra.mxu0 0.0
    %183 = vmatpush.xpose.msra.mxu0 0.0
    %184 = vmatpush.xpose.msra.mxu0 0.0
    %185 = vmatpush.xpose.msra.mxu0 0.0
    %186 = vmatpush.xpose.msra.mxu0 0.0
    %187 = vmatpush.xpose.msra.mxu0 0.0
    %188 = vmatpush.xpose.msra.mxu0 0.0
    %189 = vmatpush.xpose.msra.mxu0 0.0
    %190 = vmatpush.xpose.msra.mxu0 0.0
    %191 = vmatpush.xpose.msra.mxu0 0.0
    %192 = vmatpush.xpose.msra.mxu0 0.0
    %193 = vmatpush.xpose.msra.mxu0 0.0
    %194 = vmatpush.xpose.msra.mxu0 %v178
    %195 = vmatpush.xpose.msra.mxu0 %v176
    %196 = vmatmul.f32.gmra.mxu0 %v172
    %v197 = vpop.f32.mrf.mxu0
    %v198 = vadd.f32 0.0, %v197
    %199 = vmatmul.f32.gmra.mxu0 %v174
    %v200 = vpop.f32.mrf.mxu0
    %v201 = vadd.f32 0.0, %v200
    %202 = vdwg.mxu0
    %v203 = vmul.f32 %v198, 0.17677669
    %v204 = vmul.f32 %v201, 0.17677669
    %v205 = vlaneseq
    %v206 = vshrl.u32 %v205, 7
    %v207 = vadd.s32 %v206, 8
    %v208 = vshra.s32 %v206, 3
    %v209 = vshra.s32 %v207, 3
    %v210 = vshra.s32 %v93, 3
    %vm211 = vcmp.eq.s32.totalorder %v208, %v210
    %vm212 = vcmp.eq.s32.totalorder %v209, %v210
    %v213 = vand.u32 %v93, 7
    %v214 = vand.u32 %v206, 7
    %v215 = vand.u32 %v207, 7
    %vm216 = vcmp.le.s32.totalorder %v213, %v214
    %vm217 = vcmp.le.s32.totalorder %v213, %v215
    %vm218 = vmand %vm211, %vm216
    %vm219 = vmand %vm212, %vm217
    %v220 = vsel %vm91, 1, 0
    %v221 = vperm.slane %v220, 0
    %vm222 = vcmp.eq.s32.totalorder %v221, 1
    %vm223 = vmand %vm218, %vm222
    %vm224 = vmand %vm219, %vm222
    %v225 = vsel %vm223, %v203, -1e+09
    %v226 = vsel %vm224, %v204, -1e+09
    %vm227 = vcmask 130048
    %v228 = vsel %vm227, %v225, -inf
    %229 = vmax.xlane.f32.xlu0 %v228
    %v230 = vpop.xlane.xlu0 %229
    %v231 = vsel %vm227, %v226, -inf
    %232 = vmax.xlane.f32.xlu0 %v231
    %v233 = vpop.xlane.xlu0 %232
    %v234 = vsub.f32 %v225, %v230
    %v235 = vsub.f32 %v226, %v233
    %v236 = vmul.f32 %v234, 1.442695
    %v237 = vpow.pop %v236
    %v238 = vmul.f32 %v235, 1.442695
    %v239 = vpow.pop %v238
    %v240 = vsel %vm227, %v237, 0.0
    %241 = vadd.xlane.f32.xlu0 %v240
    %v242 = vpop.xlane.xlu0 %241
    %v243 = vsel %vm227, %v239, 0.0
    %244 = vadd.xlane.f32.xlu0 %v243
    %v245 = vpop.xlane.xlu0 %244
    %v246 = vrcp.pop %v242
    %v247 = vmul.f32 %v242, %v246
    %v248 = vsub.f32 1.0, %v247
    %v249 = vmul.f32 %v246, %v248
    %v250 = vadd.f32 %v246, %v249
    %vm251 = vweird.f32 %v242
    %vm252 = vweird.f32 %v246
    %vm253 = vmor %vm251, %vm252
    %v254 = vsel %vm253, %v246, %v250
    %v255 = vand.u32 2147483647, %v242
    %vm256 = vcmp.eq.f32.partialorder %v255, 8.507059e+37
    %v257 = vand.u32 %v242, 2147483648
    %v258 = vor.u32 1.1754944e-38, %v257
    %v259 = vsel %vm256, %v258, %v254
    %v260 = vmul.f32 %v237, %v259
    %v261 = vrcp.pop %v245
    %v262 = vmul.f32 %v245, %v261
    %v263 = vsub.f32 1.0, %v262
    %v264 = vmul.f32 %v261, %v263
    %v265 = vadd.f32 %v261, %v264
    %vm266 = vweird.f32 %v245
    %vm267 = vweird.f32 %v261
    %vm268 = vmor %vm266, %vm267
    %v269 = vsel %vm268, %v261, %v265
    %v270 = vand.u32 2147483647, %v245
    %vm271 = vcmp.eq.f32.partialorder %v270, 8.507059e+37
    %v272 = vand.u32 %v245, 2147483648
    %v273 = vor.u32 1.1754944e-38, %v272
    %v274 = vsel %vm271, %v273, %v269
    %v275 = vmul.f32 %v239, %v274
    %276 = vrot.lane.b32.xlu0 %v161, 64
    %v277 = vpop.permute.xlu0 %276
    %278 = vrot.lane.b32.xlu0 %v164, 64
    %v279 = vpop.permute.xlu0 %278
    %v283 = vsel %vm227, %v260, 0
    %v286 = vsel %vm227, %v275, 0
    %288 = vmatpush.msra.mxu0 0.0
    %289 = vmatpush.msra.mxu0 0.0
    %290 = vmatpush.msra.mxu0 0.0
    %291 = vmatpush.msra.mxu0 0.0
    %292 = vmatpush.msra.mxu0 0.0
    %293 = vmatpush.msra.mxu0 0.0
    %294 = vmatpush.msra.mxu0 0.0
    %295 = vmatpush.msra.mxu0 0.0
    %296 = vmatpush.msra.mxu0 0.0
    %297 = vmatpush.msra.mxu0 0.0
    %298 = vmatpush.msra.mxu0 0.0
    %299 = vmatpush.msra.mxu0 0.0
    %300 = vmatpush.msra.mxu0 0.0
    %301 = vmatpush.msra.mxu0 0.0
    %302 = vmatpush.msra.mxu0 %v279
    %303 = vmatpush.msra.mxu0 %v277
    %304 = vmatmul.f32.gmra.mxu0 %v283
    %v305 = vpop.f32.mrf.mxu0
    %v306 = vadd.f32 0.0, %v305
    %307 = vmatmul.f32.gmra.mxu0 %v286
    %v308 = vpop.f32.mrf.mxu0
    %v309 = vadd.f32 0.0, %v308
    %310 = vdwg.mxu0
    %v312 = vsel %vm136, %v306, 0
    %v315 = vsel %vm136, %v309, 0
    %317 = vmatpush.msra.mxu0 0.0
    %318 = vmatpush.msra.mxu0 0.0
    %319 = vmatpush.msra.mxu0 0.0
    %320 = vmatpush.msra.mxu0 0.0
    %321 = vmatpush.msra.mxu0 0.0
    %322 = vmatpush.msra.mxu0 0.0
    %323 = vmatpush.msra.mxu0 0.0
    %324 = vmatpush.msra.mxu0 0.0
    %325 = vmatpush.msra.mxu0 0.0
    %326 = vmatpush.msra.mxu0 0.0
    %327 = vmatpush.msra.mxu0 0.0
    %328 = vmatpush.msra.mxu0 0.0
    %329 = vmatpush.msra.mxu0 %v62
    %330 = vmatpush.msra.mxu0 %v61
    %331 = vmatpush.msra.mxu0 %v60
    %332 = vmatpush.msra.mxu0 %v59
    %333 = vmatmul.f32.gmra.mxu0 %v312
    %v334 = vpop.f32.mrf.mxu0
    %v335 = vadd.f32 0.0, %v334
    %336 = vmatmul.f32.gmra.mxu0 %v315
    %v337 = vpop.f32.mrf.mxu0
    %v338 = vadd.f32 0.0, %v337
    %339 = vdwg.mxu0
    %v340 = vadd.f32 %v131, %v335
    %v341 = vadd.f32 %v134, %v338
    %v343 = vperm.slane %v87, 0
    %v346 = vsel %vm136, %v340, 0
    %v349 = vsel %vm136, %v341, 0
    %351 = vmatpush.msra.mxu0 0.0
    %352 = vmatpush.msra.mxu0 0.0
    %353 = vmatpush.msra.mxu0 0.0
    %354 = vmatpush.msra.mxu0 0.0
    %355 = vmatpush.msra.mxu0 0.0
    %356 = vmatpush.msra.mxu0 0.0
    %357 = vmatpush.msra.mxu0 0.0
    %358 = vmatpush.msra.mxu0 0.0
    %359 = vmatpush.msra.mxu0 0.0
    %360 = vmatpush.msra.mxu0 0.0
    %361 = vmatpush.msra.mxu0 0.0
    %362 = vmatpush.msra.mxu0 0.0
    %363 = vmatpush.msra.mxu0 %v66
    %364 = vmatpush.msra.mxu0 %v65
    %365 = vmatpush.msra.mxu0 %v64
    %366 = vmatpush.msra.mxu0 %v63
    %367 = vmatmul.f32.gmra.mxu0 %v346
    %v368 = vpop.f32.mrf.mxu0
    %v369 = vadd.f32 %v343, %v368
    %370 = vmatmul.f32.gmra.mxu0 %v349
    %v371 = vpop.f32.mrf.mxu0
    %v372 = vadd.f32 %v343, %v371
    %373 = vdwg.mxu0
    %v374 = vmax.f32 %v369, 0.0
    %v375 = vmax.f32 %v372, 0.0
    %v377 = vsel %vm106, %v374, 0
    %v380 = vsel %vm106, %v375, 0
    %382 = vmatpush.msra.mxu0 0.0
    %383 = vmatpush.msra.mxu0 0.0
    %384 = vmatpush.msra.mxu0 0.0
    %385 = vmatpush.msra.mxu0 0.0
    %386 = vmatpush.msra.mxu0 0.0
    %387 = vmatpush.msra.mxu0 0.0
    %388 = vmatpush.msra.mxu0 0.0
    %389 = vmatpush.msra.mxu0 0.0
    %390 = vmatpush.msra.mxu0 %v86
    %391 = vmatpush.msra.mxu0 %v85
    %392 = vmatpush.msra.mxu0 %v84
    %393 = vmatpush.msra.mxu0 %v83
    %394 = vmatpush.msra.mxu0 %v82
    %395 = vmatpush.msra.mxu0 %v81
    %396 = vmatpush.msra.mxu0 %v80
    %397 = vmatpush.msra.mxu0 %v79
    %398 = vmatmul.f32.gmra.mxu0 %v377
    %v399 = vpop.f32.mrf.mxu0
    %v400 = vadd.f32 0.0, %v399
    %401 = vmatmul.f32.gmra.mxu0 %v380
    %v402 = vpop.f32.mrf.mxu0
    %v403 = vadd.f32 0.0, %v402
    %404 = vdwg.mxu0
    %v405 = vadd.f32 %v340, %v400
    %v406 = vadd.f32 %v341, %v403
    %407 = vrot.lane.b32.xlu0 %v343, 64
    %v408 = vpop.permute.xlu0 %407
    %v410 = vadd.f32 %v405, %v408
    %v411 = vadd.f32 %v406, %v408
    %v413 = vsel %vm136, %v410, 0
    %v416 = vsel %vm136, %v411, 0
    %418 = vmatpush.msra.mxu0 0.0
    %419 = vmatpush.msra.mxu0 0.0
    %420 = vmatpush.msra.mxu0 0.0
    %421 = vmatpush.msra.mxu0 0.0
    %422 = vmatpush.msra.mxu0 0.0
    %423 = vmatpush.msra.mxu0 0.0
    %424 = vmatpush.msra.mxu0 0.0
    %425 = vmatpush.msra.mxu0 0.0
    %426 = vmatpush.msra.mxu0 0.0
    %427 = vmatpush.msra.mxu0 0.0
    %428 = vmatpush.msra.mxu0 0.0
    %429 = vmatpush.msra.mxu0 0.0
    %430 = vmatpush.msra.mxu0 %v70
    %431 = vmatpush.msra.mxu0 %v69
    %432 = vmatpush.msra.mxu0 %v68
    %433 = vmatpush.msra.mxu0 %v67
    %434 = vmatmul.f32.gmra.mxu0 %v413
    %v435 = vpop.f32.mrf.mxu0
    %v436 = vadd.f32 0.0, %v435
    %437 = vmatmul.f32.gmra.mxu0 %v416
    %v438 = vpop.f32.mrf.mxu0
    %v439 = vadd.f32 0.0, %v438
    %440 = vdwg.mxu0
    %441 = vrot.lane.b32.xlu0 %v131, 64
    %v442 = vpop.permute.xlu0 %441
    %443 = vrot.lane.b32.xlu0 %v134, 64
    %v444 = vpop.permute.xlu0 %443
    %v447 = vsel %vm106, %v436, %v442
    %v448 = vsel %vm106, %v439, %v444
    %vm449 = vcmask 785408
    %v450 = vsel %vm449, %v447, 0.0
    %v451 = vsel %vm449, %v448, 0.0
    %452 = vst [vmem:[%s5] sm:$0xff] %v450
    %453 = vst [vmem:[%s5 + $0x8] sm:$0xff] %v451
    %v454 = vsel %vm106, %v436, -inf
    %455 = vmax.xlane.f32.xlu0 %v454
    %v456 = vpop.xlane.xlu0 %455
    %v457 = vsel %vm106, %v439, -inf
    %458 = vmax.xlane.f32.xlu0 %v457
    %v459 = vpop.xlane.xlu0 %458
    %v460 = vsub.f32 %v436, %v456
    %v461 = vsub.f32 %v439, %v459
    %v462 = vmul.f32 %v460, 1.442695
    %v463 = vpow.pop %v462
    %v464 = vmul.f32 %v461, 1.442695
    %v465 = vpow.pop %v464
    %v466 = vsel %vm106, %v463, 0.0
    %467 = vadd.xlane.f32.xlu0 %v466
    %v468 = vpop.xlane.xlu0 %467
    %v469 = vsel %vm106, %v465, 0.0
    %470 = vadd.xlane.f32.xlu0 %v469
    %v471 = vpop.xlane.xlu0 %470
    %v472 = vlog2.pop %v468
    %v473 = vmul.f32 %v472, 0.6931472
    %v474 = vlog2.pop %v471
    %v475 = vmul.f32 %v474, 0.6931472
    %v476 = vadd.f32 %v456, %v473
    %v477 = vadd.f32 %v459, %v475
    %478 = vset.pattern.permute.xlu0 1
    %479 = vperm.xlu0 %478, %v88
    %v480 = vpop.permute.xlu0 %479
    %481 = vset.pattern.permute.xlu0 1
    %482 = vperm.xlu0 %481, %v89
    %v483 = vpop.permute.xlu0 %482
    %vm484 = vcmp.eq.s32.totalorder %v93, %v480
    %vm485 = vcmp.eq.s32.totalorder %v93, %v483
    %v486 = vsel %vm484, %v436, 0.0
    %v487 = vsel %vm485, %v439, 0.0
    %v488 = vsel %vm106, %v486, 0.0
    %489 = vadd.xlane.f32.xlu0 %v488
    %v490 = vpop.xlane.xlu0 %489
    %v491 = vsel %vm106, %v487, 0.0
    %492 = vadd.xlane.f32.xlu0 %v491
    %v493 = vpop.xlane.xlu0 %492
    %vm494 = vcmp.ne.s32.totalorder %v88, 4294967196
    %vm495 = vcmp.ne.s32.totalorder %v89, 4294967196
    %v496 = vsel %vm494, 1, 0
    %v497 = vsel %vm495, 1, 0
    %v498 = vcvt.s32.f32 %v496
    %v499 = vcvt.s32.f32 %v497
    %v500 = vsub.f32 %v476, %v490
    %v501 = vsub.f32 %v477, %v493
    %v502 = vmul.f32 %v500, %v498
    %v503 = vmul.f32 %v501, %v499
    %506 = vrot.lane.b32.xlu0 %v502, 127
    %v507 = vpop.permute.xlu0 %506
    %508 = vrot.lane.b32.xlu0 %v503, 127
    %v509 = vpop.permute.xlu0 %508
    %vm512 = vcmask 7168
    %v513 = vsel %vm512, %v507, 0.0
    %v514 = vsel %vm512, %v509, 0.0
    %v515 = vadd.f32 %v513, %v514
    %516 = vadd.xlane.f32.xlu0 %v515
    %v517 = vpop.xlane.xlu0 %516
    %v518 = vrot.slane %v517, 4
    %v519 = vadd.f32 %v517, %v518
    %v520 = vrot.slane %v519, 2
    %v521 = vadd.f32 %v519, %v520
    %v522 = vrot.slane %v521, 1
    %v523 = vadd.f32 %v521, %v522
    %s524 = vtos %v523
    %527 = vrot.lane.b32.xlu0 %v498, 127
    %v528 = vpop.permute.xlu0 %527
    %529 = vrot.lane.b32.xlu0 %v499, 127
    %v530 = vpop.permute.xlu0 %529
    %v533 = vsel %vm512, %v528, 0.0
    %v534 = vsel %vm512, %v530, 0.0
    %v535 = vadd.f32 %v533, %v534
    %536 = vadd.xlane.f32.xlu0 %v535
    %v537 = vpop.xlane.xlu0 %536
    %v538 = vrot.slane %v537, 4
    %v539 = vadd.f32 %v537, %v538
    %v540 = vrot.slane %v539, 2
    %v541 = vadd.f32 %v539, %v540
    %v542 = vrot.slane %v541, 1
    %v543 = vadd.f32 %v541, %v542
    %s544 = vtos %v543
    %v545 = vstv %s544
    %v546 = vrcp.pop %v545
    %v547 = vmul.f32 %v545, %v546
    %v548 = vsub.f32 1.0, %v547
    %v549 = vmul.f32 %v546, %v548
    %v550 = vadd.f32 %v546, %v549
    %vm551 = vweird.f32 %v545
    %vm552 = vweird.f32 %v546
    %vm553 = vmor %vm551, %vm552
    %v554 = vsel %vm553, %v546, %v550
    %v555 = vand.u32 2147483647, %v545
    %vm556 = vcmp.eq.f32.partialorder %v555, 8.507059e+37
    %v557 = vand.u32 %v545, 2147483648
    %v558 = vor.u32 1.1754944e-38, %v557
    %v559 = vsel %vm556, %v558, %v554
    %s560 = vtos %v559
    %s561 = smul.f32 %s524, %s560
    %s562 = scalar_lea.smem [#allocation7], 0
    %563 = sst [smem:[%s562]] %s561
    // Predicated region
    $region30: #{dtt_forward.1} parent=1 // pred_check
      _
    $region31: #{dtt_forward.1} parent=1 // pred_check_branch
      %565 = sbr.rel (0) target = $region33
    $region32: #{dtt_forward.1} parent=1 // pred_region
      _
    $region33: #{dtt_forward.1} parent=1 // pred_fallthru
      _
    // Predicated region
    $region34: #{dtt_forward.1} parent=1 // pred_check
      _
    $region35: #{dtt_forward.1} parent=1 // pred_check_branch
      %567 = sbr.rel (0) target = $region37
    $region36: #{dtt_forward.1} parent=1 // pred_region
      %569 = vsyncadd [#allocation4], 0
      %s571 = sshll.u32 %s6, 4
      %s572 = int_to_ptr.hbm [resolvable:$true] %s571
      %574 = dma.smem_to_hbm [#allocation7], 16, %s572, [#allocation4]
    $region37: #{dtt_forward.1} parent=1 // pred_fallthru
      _
    // Predicated region
    $region38: #{dtt_forward.1} parent=1 // pred_check
      _
    $region39: #{dtt_forward.1} parent=1 // pred_check_branch
      %576 = sbr.rel (0) target = $region41
    $region40: #{dtt_forward.1} parent=1 // pred_region
      _
    $region41: #{dtt_forward.1} parent=1 // pred_fallthru
      _
    // Predicated region
    $region42: #{dtt_forward.1} parent=1 // pred_check
      _
    $region43: #{dtt_forward.1} parent=1 // pred_check_branch
      %578 = sbr.rel (0) target = $region45
    $region44: #{dtt_forward.1} parent=1 // pred_region
      %580 = dma.done [#allocation4], 16
    $region45: #{dtt_forward.1} parent=1 // pred_fallthru
      _
    %581 = sfence
    %582 = vsyncpa [#allocation3], 1
    %583 = vsyncpa [#allocation6], 1
    %584 = vsyncpa [#allocation4], 1

</llo_original>
